<compile_context>
chip_gen: v5e
topology: v5e:2x2
jax: 0.10.0
libtpu: 0.0.40
codegen_flags: <defaults>
</compile_context>

<pallas_src>
import jax
import jax.numpy as jnp
from jax.experimental import pallas as pl
from jax.experimental.pallas import tpu as pltpu

LANES = 128      # lane width of a vreg
TILE_ROWS = 8    # sublanes per block -> one (8,128) f32 vreg-aligned tile = 1024 samples/step


def twofc_affine_kernel(params_ref, x_ref, o_ref):
    # params_ref : SMEM (3,) f32  = [w_eff0, w_eff1, b_eff]   (folded fc1/fc2)
    # x_ref      : VMEM (2, TILE_ROWS, 128)  feature-major batch slab
    # o_ref      : VMEM (TILE_ROWS, 128)     lane/sublane-dense output slab
    w0 = params_ref[0]
    w1 = params_ref[1]
    b = params_ref[2]
    x = x_ref[...].astype(jnp.float32)          # f32 math even for bf16 storage
    y = x[0] * w0 + x[1] * w1 + b               # two VPU FMAs + broadcast; no MXU
    o_ref[...] = y.astype(o_ref.dtype)


def twofc_forward(x, w1, b1, w2, b2):
    """x: (B, 2). Weights/biases in PyTorch nn.Linear layout:
    w1 (5,2), b1 (5,), w2 (1,5), b2 (1,). Returns (B, 1)."""
    B = x.shape[0]
    out_dtype = x.dtype

    # ---- Fold fc1 -> fc2 into one affine map (exact; no nonlinearity in between).
    #   y = x @ (w2 @ w1).T + (w2 @ b1 + b2)
    w_eff = (w2 @ w1).reshape(-1).astype(jnp.float32)   # (2,)
    b_eff = (w2 @ b1 + b2).reshape(-1).astype(jnp.float32)  # (1,)
    params = jnp.concatenate([w_eff, b_eff])             # (3,) -> SMEM

    # ---- Layout plumbing: batch spread over (sublane, lane) for dense stores.
    tile_batch = TILE_ROWS * LANES
    Bp = ((B + tile_batch - 1) // tile_batch) * tile_batch
    R = Bp // LANES
    # Feature-major slab (2, R, 128); batch index b maps to (b // 128, b % 128).
    xt = jnp.zeros((2, Bp), x.dtype).at[:, :B].set(x.T).reshape(2, R, LANES)

    y_slab = pl.pallas_call(
        twofc_affine_kernel,
        out_shape=jax.ShapeDtypeStruct((R, LANES), out_dtype),
        grid=(R // TILE_ROWS,),
        in_specs=[
            # 3 folded scalars -> SMEM (no VMEM tile / DMA burned on them).
            pl.BlockSpec(memory_space=pltpu.MemorySpace.SMEM),
            # Batch-tiled input slab; weights-free so only x streams per step.
            pl.BlockSpec((2, TILE_ROWS, LANES), lambda i: (0, i, 0)),
        ],
        # Fully lane- and sublane-dense output tiles -> unmasked vst.
        out_specs=pl.BlockSpec((TILE_ROWS, LANES), lambda i: (i, 0)),
        compiler_params=pltpu.CompilerParams(
            # Independent batch tiles: pipeline + shard across TCs (v7x megacore).
            dimension_semantics=("parallel",),
        ),
    )(params, xt)

    # Back to the module's (B, 1) output.
    return y_slab.reshape(Bp, 1)[:B]


if __name__ == "__main__":
    key = jax.random.PRNGKey(0)
    kx, k1, k2, k3, k4 = jax.random.split(key, 5)

    # Batch picked to exercise the tiled grid (2 steps) and the padding path
    # (2000 -> 2048); input feature dim is 2 as the module requires.
    B = 2000
    x = jax.random.normal(kx, (B, 2), dtype=jnp.float32)

    # Parameters in PyTorch nn.Linear layout: weight (out, in), bias (out,).
    w1 = jax.random.normal(k1, (5, 2), dtype=jnp.float32) * 0.5
    b1 = jax.random.normal(k2, (5,), dtype=jnp.float32) * 0.1
    w2 = jax.random.normal(k3, (1, 5), dtype=jnp.float32) * 0.5
    b2 = jax.random.normal(k4, (1,), dtype=jnp.float32) * 0.1

    out = jax.block_until_ready(twofc_forward(x, w1, b1, w2, b2))

    # Pure-JAX reference of the ORIGINAL two-layer forward (un-folded).
    ref = (x @ w1.T + b1) @ w2.T + b2
    assert out.shape == (B, 1)
    assert jnp.allclose(out, ref, atol=1e-4, rtol=1e-4), float(jnp.max(jnp.abs(out - ref)))

    print("KERNEL_OK")
</pallas_src>

<mosaic_0001>
module attributes {stable_mosaic.version = 11 : i64} {
  func.func @twofc_affine_kernel(%arg0: i32, %arg1: memref<3xf32, #tpu.memory_space<smem>>, %arg2: memref<2x8x128xf32, #tpu.memory_space<vmem>>, %arg3: memref<8x128xf32, #tpu.memory_space<vmem>>) attributes {dimension_semantics = [#tpu.dimension_semantics<parallel>], iteration_bounds = array<i64: 2>, scalar_prefetch = 0 : i64, scratch_operands = 0 : i64, tpu.core_type = #tpu.core_type<tc>, window_params = [{transform_indices = @transform_0, window_bounds = array<i64: 3>}, {transform_indices = @transform_1, window_bounds = array<i64: 2, 8, 128>}, {transform_indices = @transform_2, window_bounds = array<i64: 8, 128>}]} {
    %c0 = arith.constant 0 : index
    %0 = memref.load %arg1[%c0] : memref<3xf32, #tpu.memory_space<smem>>
    %c1 = arith.constant 1 : index
    %1 = memref.load %arg1[%c1] : memref<3xf32, #tpu.memory_space<smem>>
    %c2 = arith.constant 2 : index
    %2 = memref.load %arg1[%c2] : memref<3xf32, #tpu.memory_space<smem>>
    %c0_0 = arith.constant 0 : index
    %c0_1 = arith.constant 0 : index
    %c0_2 = arith.constant 0 : index
    %3 = vector.load %arg2[%c0_0, %c0_1, %c0_2] : memref<2x8x128xf32, #tpu.memory_space<vmem>>, vector<2x8x128xf32>
    %4 = vector.extract_strided_slice %3 {offsets = [0, 0, 0], sizes = [1, 8, 128], strides = [1, 1, 1]} : vector<2x8x128xf32> to vector<1x8x128xf32>
    %5 = vector.shape_cast %4 : vector<1x8x128xf32> to vector<8x128xf32>
    %6 = vector.broadcast %0 : f32 to vector<8x128xf32>
    %7 = arith.mulf %5, %6 : vector<8x128xf32>
    %8 = vector.extract_strided_slice %3 {offsets = [1, 0, 0], sizes = [1, 8, 128], strides = [1, 1, 1]} : vector<2x8x128xf32> to vector<1x8x128xf32>
    %9 = vector.shape_cast %8 : vector<1x8x128xf32> to vector<8x128xf32>
    %10 = vector.broadcast %1 : f32 to vector<8x128xf32>
    %11 = arith.mulf %9, %10 : vector<8x128xf32>
    %12 = arith.addf %7, %11 : vector<8x128xf32>
    %13 = vector.broadcast %2 : f32 to vector<8x128xf32>
    %14 = arith.addf %12, %13 : vector<8x128xf32>
    %c0_3 = arith.constant 0 : index
    %c0_4 = arith.constant 0 : index
    %15 = vector.load %arg3[%c0_3, %c0_4] : memref<8x128xf32, #tpu.memory_space<vmem>>, vector<8x128xf32>
    tpu.vector_store %arg3[%c0_3, %c0_4], %14 {strides = array<i32>} : memref<8x128xf32, #tpu.memory_space<vmem>>, vector<8x128xf32>,
    return
  }
  func.func @transform_0(%arg0: i32) -> i32 {
    %c0_i32 = arith.constant 0 : i32
    %c0_i32_0 = arith.constant 0 : i32
    return %c0_i32 : i32
  }
  func.func @transform_1(%arg0: i32) -> (i32, i32, i32) {
    %c0_i32 = arith.constant 0 : i32
    %c0_i32_0 = arith.constant 0 : i32
    %c0_i32_1 = arith.constant 0 : i32
    return %c0_i32, %arg0, %c0_i32_0 : i32, i32, i32
  }
  func.func @transform_2(%arg0: i32) -> (i32, i32) {
    %c0_i32 = arith.constant 0 : i32
    %c0_i32_0 = arith.constant 0 : i32
    return %arg0, %c0_i32 : i32, i32
  }
}

</mosaic_0001>

<llo_original>
// kernel: tpu_custom_call.1
$region0: #{tpu_custom_call.1}
  #allocation0 [shape = 'u32[]', space=smem, size = 0x4, offset = 0x4, fixed_abs, tag = 'smem constant byte address 0x4 - core index']
  #allocation1 [shape = 'u32[72,128]{1,0:T(1,128)}', space=vmem, size = 0x9000, scoped, tag = 'internal scratch']
  %s0 = inlined_call_operand.hbm [shape: f32[3], index: 0, kind: input, shape index: {}]
  %s1 = inlined_call_operand.hbm [shape: f32[2,16,128], index: 1, kind: input, shape index: {}]
  %s2 = inlined_call_operand.hbm [shape: f32[16,128], index: 2, kind: output, shape index: {}]
  %s3 = sld [smem:[#allocation0]]
  $region49: #{tpu_custom_call.1} parent=0
    _
  %s5 = ssub.s32 1, %s3
  %s6 = scalar_select 0, %s5, %s3
  $region1: #{tpu_custom_call.1} parent=0
    #allocation2 [shape = 'u8[512]{0}', space=smem, size = 0x200, scoped, tag = 'input window, operand 0, single buffered']
    #allocation3 [shape = 's32[2]{0}', space=sflag, size = 0x8, scoped, tag = 'scoped memory for tpu_custom_call.1']
    #allocation4 [shape = 's32[2]{0}', space=sflag, size = 0x8, scoped, tag = 'scoped memory for tpu_custom_call.1']
    #allocation5 [shape = 's32[2]{0}', space=sflag, size = 0x8, scoped, tag = 'scoped memory for tpu_custom_call.1']
    #allocation6 [shape = 'u8[16384]{0}', space=vmem, size = 0x4000, scoped, tag = 'input window, operand 1']
    #allocation7 [shape = 'u8[8192]{0}', space=vmem, size = 0x2000, scoped, tag = 'output window, operand 0']
    %7 = vsyncpa [#allocation5], 0
    %8 = vsyncpa [#allocation3], 0
    %s9 = scalar_lea.sflag [#allocation3], 1
    %10 = vsyncpa %s9, 0
    %11 = vsyncpa [#allocation4], 0
    %s12 = scalar_lea.sflag [#allocation4], 1
    %13 = vsyncpa %s12, 0
    loop: start=0, step=1, limit=4
    $region2: #{tpu_custom_call.1} parent=1 // loop_pre_header
      _
    $region3: #{tpu_custom_call.1} parent=1 // loop_header
      %s15 = sphi 0, %s19
      %p16 = scmp.ge.s32.totalorder %s15, 4
      %s23 = sphi 0, %s23
      %s25 = sphi 0, %s23
      %s26 = sphi 0, %s25
      %s40 = sphi 0, %s26
      %s46 = sphi 0, %s48
      %s49 = sphi 0, %s46
      %s50 = sphi 0, %s49
      %s66 = sphi 0, %s50
      %s72 = sphi 0, %s74
      %s75 = sphi 0, %s72
      %s76 = sphi 0, %s75
      %s92 = sphi 0, %s76
    $region4: #{tpu_custom_call.1} parent=1 // loop_header_branch
      %18 = sbr.rel (%p16) target = $region8
    $region5: #{tpu_custom_call.1} parent=1 // loop_body
      %s20 = ssub.s32 %s15, 1
      %s21 = ssub.s32 %s15, 2
      %s22 = sadd.s32 %s15, 1
      %s24 = sadd.s32 %s23, 1
      %p27 = scmp.eq.s32.totalorder %s15, 1
      %p28 = scmp.ne.s32.totalorder %s23, %s25
      %p29 = scmp.eq.s32.totalorder %s15, 0
      %p30 = por %p28, %p29
      %p31 = scmp.ne.s32.totalorder %s23, %s25
      %p32 = scmp.eq.s32.totalorder %s20, 1
      %p33 = por %p31, %p32
      %p34 = scmp.ne.s32.totalorder %s25, %s26
      %p35 = scmp.eq.s32.totalorder %s20, 0
      %p36 = por %p34, %p35
      %p37 = scmp.ne.s32.totalorder %s25, %s26
      %p38 = scmp.eq.s32.totalorder %s21, 1
      %p39 = por %p37, %p38
      %p41 = scmp.ne.s32.totalorder %s26, %s40
      %p42 = scmp.eq.s32.totalorder %s21, 0
      %p43 = por %p41, %p42
      %s44 = ssub.s32 %s15, %s22
      %p45 = scmp.eq.s32.totalorder %s44, 0
      %s47 = sadd.s32 %s46, 1
      %s48 = scalar_select %p45, %s46, %s47
      %p51 = pneg %p45
      %p52 = scmp.eq.s32.totalorder %s15, 1
      %p53 = por %p51, %p52
      %p54 = scmp.ne.s32.totalorder %s46, %s49
      %p55 = scmp.eq.s32.totalorder %s15, 0
      %p56 = por %p54, %p55
      %p57 = scmp.ne.s32.totalorder %s46, %s49
      %p58 = scmp.eq.s32.totalorder %s20, 1
      %p59 = por %p57, %p58
      %p60 = scmp.ne.s32.totalorder %s49, %s50
      %p61 = scmp.eq.s32.totalorder %s20, 0
      %p62 = por %p60, %p61
      %p63 = scmp.ne.s32.totalorder %s49, %s50
      %p64 = scmp.eq.s32.totalorder %s21, 1
      %p65 = por %p63, %p64
      %p67 = scmp.ne.s32.totalorder %s50, %s66
      %p68 = scmp.eq.s32.totalorder %s21, 0
      %p69 = por %p67, %p68
      %s70 = ssub.s32 %s15, %s22
      %p71 = scmp.eq.s32.totalorder %s70, 0
      %s73 = sadd.s32 %s72, 1
      %s74 = scalar_select %p71, %s72, %s73
      %p77 = pneg %p71
      %p78 = scmp.eq.s32.totalorder %s15, 1
      %p79 = por %p77, %p78
      %p80 = scmp.ne.s32.totalorder %s72, %s75
      %p81 = scmp.eq.s32.totalorder %s15, 0
      %p82 = por %p80, %p81
      %p83 = scmp.ne.s32.totalorder %s72, %s75
      %p84 = scmp.eq.s32.totalorder %s20, 1
      %p85 = por %p83, %p84
      %p86 = scmp.ne.s32.totalorder %s75, %s76
      %p87 = scmp.eq.s32.totalorder %s20, 0
      %p88 = por %p86, %p87
      %p89 = scmp.ne.s32.totalorder %s75, %s76
      %p90 = scmp.eq.s32.totalorder %s21, 1
      %p91 = por %p89, %p90
      %p93 = scmp.ne.s32.totalorder %s76, %s92
      %p94 = scmp.eq.s32.totalorder %s21, 0
      %p95 = por %p93, %p94
      %p96 = scmp.le.s32.totalorder 1, %s15
      %p97 = scmp.lt.s32.totalorder %s15, 3
      %p98 = pnand %p96, %p97
      %p99 = pneg %p98
      // Predicated region
      $region9: #{tpu_custom_call.1} parent=5 // pred_check
        _
      $region10: #{tpu_custom_call.1} parent=5 // pred_check_branch
        %101 = sbr.rel (%p98) target = $region12
      $region11: #{tpu_custom_call.1} parent=5 // pred_region
        %s102 = ssub.s32 %s15, 1
        // Predicated region
        $region13: #{tpu_custom_call.1} parent=11 // pred_check
          %p103 = pneg %p36
        $region14: #{tpu_custom_call.1} parent=11 // pred_check_branch
          %105 = sbr.rel (%p103) target = $region16
        $region15: #{tpu_custom_call.1} parent=11 // pred_region
          %107 = vsyncadd [#allocation5], 0
          %s109 = sshll.u32 %s0, 4
          %s110 = int_to_ptr.hbm [resolvable:$true] %s109
          %112 = dma.hbm_to_smem %s110, 16, [#allocation2], [#allocation5]
        $region16: #{tpu_custom_call.1} parent=11 // pred_fallthru
          _
      $region12: #{tpu_custom_call.1} parent=5 // pred_fallthru
        _
      %p113 = scmp.lt.s32.totalorder %s15, 2
      // Predicated region
      $region17: #{tpu_custom_call.1} parent=5 // pred_check
        %p114 = pneg %p113
      $region18: #{tpu_custom_call.1} parent=5 // pred_check_branch
        %116 = sbr.rel (%p114) target = $region20
      $region19: #{tpu_custom_call.1} parent=5 // pred_region
        // Predicated region
        $region21: #{tpu_custom_call.1} parent=19 // pred_check
          %p117 = pneg %p56
        $region22: #{tpu_custom_call.1} parent=19 // pred_check_branch
          %119 = sbr.rel (%p117) target = $region24
        $region23: #{tpu_custom_call.1} parent=19 // pred_region
          %s120 = sand.u32 %s46, 1
          %s121 = scalar_lea.sflag [#allocation3], %s120
          %s122 = sand.u32 %s46, 1
          %s123 = smul.addr %s122, 16
          %s124 = scalar_lea.vmem [#allocation6], %s123
          %126 = vsyncadd %s121, 0
          %s127 = smul.addr %s15, 8
          %s128 = scalar_lea.hbm %s1, %s127
          %s129 = sshll.u32 %s128, 4
          %s130 = int_to_ptr.hbm [resolvable:$true] %s129
          %s131 = sshll.u32 %s124, 4
          %s132 = int_to_ptr.vmem [resolvable:$true] %s131
          %137 = dma.hbm_to_vmem [thread:$0]  %s130, 256, %s132, %s121, 256, 128, 8
        $region24: #{tpu_custom_call.1} parent=19 // pred_fallthru
          _
      $region20: #{tpu_custom_call.1} parent=5 // pred_fallthru
        _
      %p138 = scmp.le.s32.totalorder 1, %s15
      %p139 = scmp.lt.s32.totalorder %s15, 3
      %p140 = pnand %p138, %p139
      %p141 = pneg %p140
      // Predicated region
      $region25: #{tpu_custom_call.1} parent=5 // pred_check
        _
      $region26: #{tpu_custom_call.1} parent=5 // pred_check_branch
        %143 = sbr.rel (%p140) target = $region28
      $region27: #{tpu_custom_call.1} parent=5 // pred_region
        %s144 = ssub.s32 %s15, 1
        // Predicated region
        $region29: #{tpu_custom_call.1} parent=27 // pred_check
          %p145 = pneg %p36
        $region30: #{tpu_custom_call.1} parent=27 // pred_check_branch
          %147 = sbr.rel (%p145) target = $region32
        $region31: #{tpu_custom_call.1} parent=27 // pred_region
          %149 = dma.done [#allocation5], 16
        $region32: #{tpu_custom_call.1} parent=27 // pred_fallthru
          _
        %s150 = sand.u32 %s49, 1
        %s151 = scalar_lea.sflag [#allocation3], %s150
        %s152 = sand.u32 %s49, 1
        %s153 = smul.addr %s152, 16
        %s154 = scalar_lea.vmem [#allocation6], %s153
        // Predicated region
        $region33: #{tpu_custom_call.1} parent=27 // pred_check
          %p155 = pneg %p62
        $region34: #{tpu_custom_call.1} parent=27 // pred_check_branch
          %157 = sbr.rel (%p155) target = $region36
        $region35: #{tpu_custom_call.1} parent=27 // pred_region
          %159 = dma.done %s151, 256
        $region36: #{tpu_custom_call.1} parent=27 // pred_fallthru
          _
        %160 = sfence
        %p161 = pneg %p36
        %p162 = pneg %p33
        %s163 = sand.u32 %s49, 1
        %s164 = scalar_lea.sflag [#allocation3], %s163
        %s165 = sand.u32 %s49, 1
        %s166 = smul.addr %s165, 16
        %s167 = scalar_lea.vmem [#allocation6], %s166
        %p168 = pneg %p62
        %p169 = pneg %p59
        %p170 = pneg %p88
        %p171 = pneg %p85
        %s172 = sand.u32 %s75, 1
        %s173 = scalar_lea.sflag [#allocation4], %s172
        %s174 = sand.u32 %s75, 1
        %s175 = smul.addr %s174, 8
        %s176 = scalar_lea.vmem [#allocation7], %s175
        %s177 = sld [smem:[#allocation2]]
        %s178 = sld [smem:[#allocation2 + $0x1]]
        %s179 = sld [smem:[#allocation2 + $0x2]]
        %v180 = vld [vmem:[%s154] sm:$0xff]
        %v181 = vld [vmem:[%s154 + $0x8] sm:$0xff]
        %v182 = vstv %s177
        %v183 = vmul.f32 %v180, %v182
        %v184 = vstv %s178
        %v185 = vmul.f32 %v181, %v184
        %v186 = vadd.f32 %v183, %v185
        %v187 = vstv %s179
        %v188 = vadd.f32 %v186, %v187
        %189 = vst [vmem:[%s176] sm:$0xff] %v188
        %s190 = sand.u32 %s75, 1
        %s191 = scalar_lea.sflag [#allocation4], %s190
        %s192 = sand.u32 %s75, 1
        %s193 = smul.addr %s192, 8
        %s194 = scalar_lea.vmem [#allocation7], %s193
        // Predicated region
        $region37: #{tpu_custom_call.1} parent=27 // pred_check
          %p195 = pneg %p85
        $region38: #{tpu_custom_call.1} parent=27 // pred_check_branch
          %197 = sbr.rel (%p195) target = $region40
        $region39: #{tpu_custom_call.1} parent=27 // pred_region
          %199 = vsyncadd %s191, 0
          %s200 = smul.addr %s20, 8
          %s201 = scalar_lea.hbm %s2, %s200
          %s203 = sshll.u32 %s194, 4
          %s204 = int_to_ptr.vmem [resolvable:$true] %s203
          %s205 = sshll.u32 %s201, 4
          %s206 = int_to_ptr.hbm [resolvable:$true] %s205
          %208 = dma.vmem_to_hbm [thread:$0]  %s204, 128, %s206, %s191
        $region40: #{tpu_custom_call.1} parent=27 // pred_fallthru
          _
      $region28: #{tpu_custom_call.1} parent=5 // pred_fallthru
        _
      %p209 = scmp.le.s32.totalorder 2, %s15
      // Predicated region
      $region41: #{tpu_custom_call.1} parent=5 // pred_check
        %p210 = pneg %p209
      $region42: #{tpu_custom_call.1} parent=5 // pred_check_branch
        %212 = sbr.rel (%p210) target = $region44
      $region43: #{tpu_custom_call.1} parent=5 // pred_region
        %s213 = ssub.s32 %s15, 2
        // Predicated region
        $region45: #{tpu_custom_call.1} parent=43 // pred_check
          %p214 = pneg %p91
        $region46: #{tpu_custom_call.1} parent=43 // pred_check_branch
          %216 = sbr.rel (%p214) target = $region48
        $region47: #{tpu_custom_call.1} parent=43 // pred_region
          %s217 = sand.u32 %s76, 1
          %s218 = scalar_lea.sflag [#allocation4], %s217
          %s219 = sand.u32 %s76, 1
          %s220 = smul.addr %s219, 8
          %s221 = scalar_lea.vmem [#allocation7], %s220
          %223 = dma.done %s218, 128
        $region48: #{tpu_custom_call.1} parent=43 // pred_fallthru
          _
      $region44: #{tpu_custom_call.1} parent=5 // pred_fallthru
        _
    $region6: #{tpu_custom_call.1} parent=1 // loop_footer
      %s19 = sadd.s32 1, %s15
    $region7: #{tpu_custom_call.1} parent=1 // loop_footer_branch
      %14 = sbr.rel target = $region3
    $region8: #{tpu_custom_call.1} parent=1 // loop_exit
      _
    %224 = vsyncpa [#allocation3], 1
    %s225 = scalar_lea.sflag [#allocation3], 1
    %226 = vsyncpa %s225, 1
    %227 = vsyncpa [#allocation4], 1
    %s228 = scalar_lea.sflag [#allocation4], 1
    %229 = vsyncpa %s228, 1
    %230 = vsyncpa [#allocation5], 1
    %s231 = scalar_lea.sflag [#allocation5], 1
    %232 = vsyncpa %s231, 1

</llo_original>
